<compile_context>
chip_gen: v6e
topology: v6e:2x2x1
jax: 0.10.0
libtpu: 0.0.40
codegen_flags: <defaults>
</compile_context>

<pallas_src>
import jax
import jax.numpy as jnp
from jax import lax
from jax.experimental import pallas as pl
from jax.experimental.pallas import tpu as pltpu

EPS = 1e-5  # torch.nn.BatchNorm1d default eps


def nfm_kernel(idx_ref, emb_ref, bn1_g_ref, bn1_b_ref, w1_ref, b1_ref,
               bn2_g_ref, bn2_b_ref, w2_ref, b2_ref, out_ref):
    B, F = idx_ref.shape
    V, E = emb_ref.shape

    # ---- count matrix: counts[b, v] = # of times vocab id v appears in row b -
    idx = idx_ref[...]                                          # (B, F) int32
    iota_v = lax.broadcasted_iota(jnp.int32, (B, V), 1)         # (B, V)
    counts = jnp.zeros((B, V), dtype=jnp.float32)
    for f in range(F):                                          # F is small/static
        counts = counts + (idx[:, f:f + 1] == iota_v).astype(jnp.float32)

    # ---- embedding lookup + field sums as two tiny MXU matmuls -------------
    table = emb_ref[...]                                        # (V, E) f32
    sum_e = jnp.dot(counts, table, preferred_element_type=jnp.float32)          # (B, E)
    sum_sq = jnp.dot(counts, table * table, preferred_element_type=jnp.float32)  # (B, E)

    # ---- bi-interaction: sum_{i<j} e_i*e_j = 0.5*((sum e)^2 - sum e^2) ------
    bi = 0.5 * (sum_e * sum_e - sum_sq)

    # ---- BatchNorm1d (training-mode batch stats, biased var) + relu ---------
    mean1 = jnp.mean(bi, axis=0, keepdims=True)
    var1 = jnp.mean((bi - mean1) * (bi - mean1), axis=0, keepdims=True)
    x = bn1_g_ref[...] * (bi - mean1) * lax.rsqrt(var1 + EPS) + bn1_b_ref[...]
    x = jnp.maximum(x, 0.0)

    # ---- fc_layer (f32 MXU) -> BN -> relu -> dropout(identity) --------------
    h = jnp.dot(x, w1_ref[...], preferred_element_type=jnp.float32) + b1_ref[...]
    mean2 = jnp.mean(h, axis=0, keepdims=True)
    var2 = jnp.mean((h - mean2) * (h - mean2), axis=0, keepdims=True)
    h = bn2_g_ref[...] * (h - mean2) * lax.rsqrt(var2 + EPS) + bn2_b_ref[...]
    h = jnp.maximum(h, 0.0)

    # ---- last_layer (N=1): VPU multiply + lane reduce instead of MXU matmul -
    logits = jnp.sum(h * w2_ref[...], axis=-1, keepdims=True) + b2_ref[0]
    out_ref[...] = jax.nn.sigmoid(logits)                       # (B, 1)


def nfm_forward(indices, params):
    B, F = indices.shape
    V, E = params["embedding"].shape
    H = params["w1"].shape[1]

    w2_row = params["w2"].reshape(1, H).astype(jnp.float32)     # (H,1) -> (1,H)
    b2_scalar = params["b2"].reshape(1).astype(jnp.float32)     # SMEM scalar

    vmem = pl.BlockSpec(memory_space=pltpu.MemorySpace.VMEM)
    smem = pl.BlockSpec(memory_space=pltpu.MemorySpace.SMEM)

    flops = (2 * B * V * F                 # count-matrix build
             + 4 * B * V * E               # two (B,V)x(V,E) matmuls
             + 3 * B * E                   # bi-interaction combine
             + 10 * B * E + 10 * B * H     # batch norms + relu
             + 2 * B * E * H + B * H       # fc-layer matmul + bias
             + 3 * B * H)                  # last-layer reduce
    bytes_accessed = (B * F * 4                      # indices
                      + V * E * 4                    # full embedding table
                      + 2 * E * 4 + 2 * H * 4        # BN params
                      + E * H * 4 + H * 4            # w1, b1
                      + H * 4 + 4                    # w2, b2
                      + B * 4)                       # output
    cost = pl.CostEstimate(flops=flops, transcendentals=B + E + H,
                           bytes_accessed=bytes_accessed)

    return pl.pallas_call(
        nfm_kernel,
        out_shape=jax.ShapeDtypeStruct((B, 1), jnp.float32),
        in_specs=[vmem, vmem, vmem, vmem, vmem, vmem, vmem, vmem, vmem, smem],
        out_specs=vmem,
        cost_estimate=cost,
    )(indices.astype(jnp.int32),
      params["embedding"].astype(jnp.float32),
      params["bn1_gamma"], params["bn1_beta"],
      params["w1"], params["b1"],
      params["bn2_gamma"], params["bn2_beta"],
      w2_row, b2_scalar)


def nfm_reference(indices, params):
    # Pure f32 reference mirroring the torch module's forward (dropout = identity).
    emb = params["embedding"][indices].astype(jnp.float32)
    sum_e = jnp.sum(emb, axis=1)
    sum_sq = jnp.sum(emb * emb, axis=1)
    bi = 0.5 * (sum_e * sum_e - sum_sq)
    m1 = jnp.mean(bi, axis=0, keepdims=True)
    v1 = jnp.mean((bi - m1) ** 2, axis=0, keepdims=True)
    x = params["bn1_gamma"] * (bi - m1) / jnp.sqrt(v1 + EPS) + params["bn1_beta"]
    x = jnp.maximum(x, 0.0)
    h = x @ params["w1"] + params["b1"]
    m2 = jnp.mean(h, axis=0, keepdims=True)
    v2 = jnp.mean((h - m2) ** 2, axis=0, keepdims=True)
    h = params["bn2_gamma"] * (h - m2) / jnp.sqrt(v2 + EPS) + params["bn2_beta"]
    h = jnp.maximum(h, 0.0)
    out = h @ params["w2"] + params["b2"]
    return jax.nn.sigmoid(out)


if __name__ == "__main__":
    # Small shapes consistent with the module's forward:
    # x: (B, F) int indices, embedding_size E, hidden_size H, layers=1.
    B, F, V, E, H = 8, 6, 50, 32, 32

    key = jax.random.PRNGKey(0)
    k_idx, k_emb, k_w1, k_b1, k_w2, k_b2 = jax.random.split(key, 6)

    indices = jax.random.randint(k_idx, (B, F), 0, V, dtype=jnp.int32)

    params = {
        # nn.Embedding default init: N(0, 1)
        "embedding": jax.random.normal(k_emb, (V, E), dtype=jnp.float32),
        # BatchNorm1d defaults: gamma=1, beta=0
        "bn1_gamma": jnp.ones((1, E), jnp.float32),
        "bn1_beta": jnp.zeros((1, E), jnp.float32),
        "bn2_gamma": jnp.ones((1, H), jnp.float32),
        "bn2_beta": jnp.zeros((1, H), jnp.float32),
        # Linear layers: uniform(-1/sqrt(fan_in), 1/sqrt(fan_in))
        "w1": jax.random.uniform(k_w1, (E, H), jnp.float32,
                                 minval=-1.0 / (E ** 0.5), maxval=1.0 / (E ** 0.5)),
        "b1": jax.random.uniform(k_b1, (1, H), jnp.float32,
                                 minval=-1.0 / (E ** 0.5), maxval=1.0 / (E ** 0.5)),
        "w2": jax.random.uniform(k_w2, (H, 1), jnp.float32,
                                 minval=-1.0 / (H ** 0.5), maxval=1.0 / (H ** 0.5)),
        "b2": jax.random.uniform(k_b2, (1, 1), jnp.float32,
                                 minval=-1.0 / (H ** 0.5), maxval=1.0 / (H ** 0.5)),
    }

    out = jax.block_until_ready(nfm_forward(indices, params))
    ref = jax.block_until_ready(nfm_reference(indices, params))

    assert out.shape == (B, 1), out.shape
    # All kernel math is f32 now; tolerance only covers MXU/EUP rounding vs XLA.
    assert jnp.allclose(out, ref, rtol=2e-3, atol=2e-3), (out, ref)
    print("KERNEL_OK")
</pallas_src>

<mosaic_0001>
module attributes {stable_mosaic.version = 11 : i64} {
  func.func @nfm_kernel(%arg0: memref<8x6xi32, #tpu.memory_space<vmem>>, %arg1: memref<50x32xf32, #tpu.memory_space<vmem>>, %arg2: memref<1x32xf32, #tpu.memory_space<vmem>>, %arg3: memref<1x32xf32, #tpu.memory_space<vmem>>, %arg4: memref<32x32xf32, #tpu.memory_space<vmem>>, %arg5: memref<1x32xf32, #tpu.memory_space<vmem>>, %arg6: memref<1x32xf32, #tpu.memory_space<vmem>>, %arg7: memref<1x32xf32, #tpu.memory_space<vmem>>, %arg8: memref<1x32xf32, #tpu.memory_space<vmem>>, %arg9: memref<1xf32, #tpu.memory_space<smem>>, %arg10: memref<8x1xf32, #tpu.memory_space<vmem>>) attributes {dimension_semantics = [], scalar_prefetch = 0 : i64, scratch_operands = 0 : i64, tpu.core_type = #tpu.core_type<tc>} {
    %c0 = arith.constant 0 : index
    %c0_0 = arith.constant 0 : index
    %0 = vector.load %arg0[%c0, %c0_0] : memref<8x6xi32, #tpu.memory_space<vmem>>, vector<8x6xi32>
    %1 = tpu.iota {dimensions = array<i32: 1>} : vector<8x50xi32>
    %cst = arith.constant 0.000000e+00 : f32
    %2 = vector.broadcast %cst : f32 to vector<8x50xf32>
    %3 = vector.extract_strided_slice %0 {offsets = [0, 0], sizes = [8, 1], strides = [1, 1]} : vector<8x6xi32> to vector<8x1xi32>
    %4 = vector.broadcast %3 : vector<8x1xi32> to vector<8x50xi32>
    %5 = arith.cmpi eq, %4, %1 : vector<8x50xi32>
    %6 = arith.extui %5 : vector<8x50xi1> to vector<8x50xi32>
    %7 = arith.sitofp %6 : vector<8x50xi32> to vector<8x50xf32>
    %8 = arith.addf %2, %7 : vector<8x50xf32>
    %9 = vector.extract_strided_slice %0 {offsets = [0, 1], sizes = [8, 1], strides = [1, 1]} : vector<8x6xi32> to vector<8x1xi32>
    %10 = vector.broadcast %9 : vector<8x1xi32> to vector<8x50xi32>
    %11 = arith.cmpi eq, %10, %1 : vector<8x50xi32>
    %12 = arith.extui %11 : vector<8x50xi1> to vector<8x50xi32>
    %13 = arith.sitofp %12 : vector<8x50xi32> to vector<8x50xf32>
    %14 = arith.addf %8, %13 : vector<8x50xf32>
    %15 = vector.extract_strided_slice %0 {offsets = [0, 2], sizes = [8, 1], strides = [1, 1]} : vector<8x6xi32> to vector<8x1xi32>
    %16 = vector.broadcast %15 : vector<8x1xi32> to vector<8x50xi32>
    %17 = arith.cmpi eq, %16, %1 : vector<8x50xi32>
    %18 = arith.extui %17 : vector<8x50xi1> to vector<8x50xi32>
    %19 = arith.sitofp %18 : vector<8x50xi32> to vector<8x50xf32>
    %20 = arith.addf %14, %19 : vector<8x50xf32>
    %21 = vector.extract_strided_slice %0 {offsets = [0, 3], sizes = [8, 1], strides = [1, 1]} : vector<8x6xi32> to vector<8x1xi32>
    %22 = vector.broadcast %21 : vector<8x1xi32> to vector<8x50xi32>
    %23 = arith.cmpi eq, %22, %1 : vector<8x50xi32>
    %24 = arith.extui %23 : vector<8x50xi1> to vector<8x50xi32>
    %25 = arith.sitofp %24 : vector<8x50xi32> to vector<8x50xf32>
    %26 = arith.addf %20, %25 : vector<8x50xf32>
    %27 = vector.extract_strided_slice %0 {offsets = [0, 4], sizes = [8, 1], strides = [1, 1]} : vector<8x6xi32> to vector<8x1xi32>
    %28 = vector.broadcast %27 : vector<8x1xi32> to vector<8x50xi32>
    %29 = arith.cmpi eq, %28, %1 : vector<8x50xi32>
    %30 = arith.extui %29 : vector<8x50xi1> to vector<8x50xi32>
    %31 = arith.sitofp %30 : vector<8x50xi32> to vector<8x50xf32>
    %32 = arith.addf %26, %31 : vector<8x50xf32>
    %33 = vector.extract_strided_slice %0 {offsets = [0, 5], sizes = [8, 1], strides = [1, 1]} : vector<8x6xi32> to vector<8x1xi32>
    %34 = vector.broadcast %33 : vector<8x1xi32> to vector<8x50xi32>
    %35 = arith.cmpi eq, %34, %1 : vector<8x50xi32>
    %36 = arith.extui %35 : vector<8x50xi1> to vector<8x50xi32>
    %37 = arith.sitofp %36 : vector<8x50xi32> to vector<8x50xf32>
    %38 = arith.addf %32, %37 : vector<8x50xf32>
    %c0_1 = arith.constant 0 : index
    %c0_2 = arith.constant 0 : index
    %39 = vector.load %arg1[%c0_1, %c0_2] : memref<50x32xf32, #tpu.memory_space<vmem>>, vector<50x32xf32>
    %cst_3 = arith.constant dense<0.000000e+00> : vector<8x32xf32>
    %40 = tpu.matmul %38, %39, %cst_3 {dimension_numbers = #tpu.dot_dimension_numbers<[1], [0], [0], [1], [0, 0, 1, 1], [], []>} : vector<8x50xf32>, vector<50x32xf32>, vector<8x32xf32> -> vector<8x32xf32>
    %41 = arith.mulf %39, %39 : vector<50x32xf32>
    %cst_4 = arith.constant dense<0.000000e+00> : vector<8x32xf32>
    %42 = tpu.matmul %38, %41, %cst_4 {dimension_numbers = #tpu.dot_dimension_numbers<[1], [0], [0], [1], [0, 0, 1, 1], [], []>} : vector<8x50xf32>, vector<50x32xf32>, vector<8x32xf32> -> vector<8x32xf32>
    %43 = arith.mulf %40, %40 : vector<8x32xf32>
    %44 = arith.subf %43, %42 : vector<8x32xf32>
    %cst_5 = arith.constant 5.000000e-01 : f32
    %45 = vector.broadcast %cst_5 : f32 to vector<8x32xf32>
    %46 = arith.mulf %45, %44 : vector<8x32xf32>
    %cst_6 = arith.constant dense<0.000000e+00> : vector<32xf32>
    %47 = vector.multi_reduction <add>, %46, %cst_6 [0] : vector<8x32xf32> to vector<32xf32>
    %48 = vector.shape_cast %47 : vector<32xf32> to vector<1x32xf32>
    %cst_7 = arith.constant 8.000000e+00 : f32
    %49 = vector.broadcast %cst_7 : f32 to vector<1x32xf32>
    %50 = arith.divf %48, %49 : vector<1x32xf32>
    %51 = vector.broadcast %50 : vector<1x32xf32> to vector<8x32xf32>
    %52 = arith.subf %46, %51 : vector<8x32xf32>
    %53 = vector.broadcast %50 : vector<1x32xf32> to vector<8x32xf32>
    %54 = arith.subf %46, %53 : vector<8x32xf32>
    %55 = arith.mulf %52, %54 : vector<8x32xf32>
    %cst_8 = arith.constant dense<0.000000e+00> : vector<32xf32>
    %56 = vector.multi_reduction <add>, %55, %cst_8 [0] : vector<8x32xf32> to vector<32xf32>
    %57 = vector.shape_cast %56 : vector<32xf32> to vector<1x32xf32>
    %cst_9 = arith.constant 8.000000e+00 : f32
    %58 = vector.broadcast %cst_9 : f32 to vector<1x32xf32>
    %59 = arith.divf %57, %58 : vector<1x32xf32>
    %c0_10 = arith.constant 0 : index
    %c0_11 = arith.constant 0 : index
    %60 = vector.load %arg2[%c0_10, %c0_11] : memref<1x32xf32, #tpu.memory_space<vmem>>, vector<1x32xf32>
    %61 = vector.broadcast %50 : vector<1x32xf32> to vector<8x32xf32>
    %62 = arith.subf %46, %61 : vector<8x32xf32>
    %63 = vector.broadcast %60 : vector<1x32xf32> to vector<8x32xf32>
    %64 = arith.mulf %63, %62 : vector<8x32xf32>
    %cst_12 = arith.constant 9.99999974E-6 : f32
    %65 = vector.broadcast %cst_12 : f32 to vector<1x32xf32>
    %66 = arith.addf %59, %65 : vector<1x32xf32>
    %67 = math.rsqrt %66 : vector<1x32xf32>
    %68 = vector.broadcast %67 : vector<1x32xf32> to vector<8x32xf32>
    %69 = arith.mulf %64, %68 : vector<8x32xf32>
    %c0_13 = arith.constant 0 : index
    %c0_14 = arith.constant 0 : index
    %70 = vector.load %arg3[%c0_13, %c0_14] : memref<1x32xf32, #tpu.memory_space<vmem>>, vector<1x32xf32>
    %71 = vector.broadcast %70 : vector<1x32xf32> to vector<8x32xf32>
    %72 = arith.addf %69, %71 : vector<8x32xf32>
    %cst_15 = arith.constant 0.000000e+00 : f32
    %73 = vector.broadcast %cst_15 : f32 to vector<8x32xf32>
    %74 = arith.maximumf %72, %73 : vector<8x32xf32>
    %c0_16 = arith.constant 0 : index
    %c0_17 = arith.constant 0 : index
    %75 = vector.load %arg4[%c0_16, %c0_17] : memref<32x32xf32, #tpu.memory_space<vmem>>, vector<32x32xf32>
    %cst_18 = arith.constant dense<0.000000e+00> : vector<8x32xf32>
    %76 = tpu.matmul %74, %75, %cst_18 {dimension_numbers = #tpu.dot_dimension_numbers<[1], [0], [0], [1], [0, 0, 1, 1], [], []>} : vector<8x32xf32>, vector<32x32xf32>, vector<8x32xf32> -> vector<8x32xf32>
    %c0_19 = arith.constant 0 : index
    %c0_20 = arith.constant 0 : index
    %77 = vector.load %arg5[%c0_19, %c0_20] : memref<1x32xf32, #tpu.memory_space<vmem>>, vector<1x32xf32>
    %78 = vector.broadcast %77 : vector<1x32xf32> to vector<8x32xf32>
    %79 = arith.addf %76, %78 : vector<8x32xf32>
    %cst_21 = arith.constant dense<0.000000e+00> : vector<32xf32>
    %80 = vector.multi_reduction <add>, %79, %cst_21 [0] : vector<8x32xf32> to vector<32xf32>
    %81 = vector.shape_cast %80 : vector<32xf32> to vector<1x32xf32>
    %cst_22 = arith.constant 8.000000e+00 : f32
    %82 = vector.broadcast %cst_22 : f32 to vector<1x32xf32>
    %83 = arith.divf %81, %82 : vector<1x32xf32>
    %84 = vector.broadcast %83 : vector<1x32xf32> to vector<8x32xf32>
    %85 = arith.subf %79, %84 : vector<8x32xf32>
    %86 = vector.broadcast %83 : vector<1x32xf32> to vector<8x32xf32>
    %87 = arith.subf %79, %86 : vector<8x32xf32>
    %88 = arith.mulf %85, %87 : vector<8x32xf32>
    %cst_23 = arith.constant dense<0.000000e+00> : vector<32xf32>
    %89 = vector.multi_reduction <add>, %88, %cst_23 [0] : vector<8x32xf32> to vector<32xf32>
    %90 = vector.shape_cast %89 : vector<32xf32> to vector<1x32xf32>
    %cst_24 = arith.constant 8.000000e+00 : f32
    %91 = vector.broadcast %cst_24 : f32 to vector<1x32xf32>
    %92 = arith.divf %90, %91 : vector<1x32xf32>
    %c0_25 = arith.constant 0 : index
    %c0_26 = arith.constant 0 : index
    %93 = vector.load %arg6[%c0_25, %c0_26] : memref<1x32xf32, #tpu.memory_space<vmem>>, vector<1x32xf32>
    %94 = vector.broadcast %83 : vector<1x32xf32> to vector<8x32xf32>
    %95 = arith.subf %79, %94 : vector<8x32xf32>
    %96 = vector.broadcast %93 : vector<1x32xf32> to vector<8x32xf32>
    %97 = arith.mulf %96, %95 : vector<8x32xf32>
    %cst_27 = arith.constant 9.99999974E-6 : f32
    %98 = vector.broadcast %cst_27 : f32 to vector<1x32xf32>
    %99 = arith.addf %92, %98 : vector<1x32xf32>
    %100 = math.rsqrt %99 : vector<1x32xf32>
    %101 = vector.broadcast %100 : vector<1x32xf32> to vector<8x32xf32>
    %102 = arith.mulf %97, %101 : vector<8x32xf32>
    %c0_28 = arith.constant 0 : index
    %c0_29 = arith.constant 0 : index
    %103 = vector.load %arg7[%c0_28, %c0_29] : memref<1x32xf32, #tpu.memory_space<vmem>>, vector<1x32xf32>
    %104 = vector.broadcast %103 : vector<1x32xf32> to vector<8x32xf32>
    %105 = arith.addf %102, %104 : vector<8x32xf32>
    %cst_30 = arith.constant 0.000000e+00 : f32
    %106 = vector.broadcast %cst_30 : f32 to vector<8x32xf32>
    %107 = arith.maximumf %105, %106 : vector<8x32xf32>
    %c0_31 = arith.constant 0 : index
    %c0_32 = arith.constant 0 : index
    %108 = vector.load %arg8[%c0_31, %c0_32] : memref<1x32xf32, #tpu.memory_space<vmem>>, vector<1x32xf32>
    %109 = vector.broadcast %108 : vector<1x32xf32> to vector<8x32xf32>
    %110 = arith.mulf %107, %109 : vector<8x32xf32>
    %cst_33 = arith.constant dense<0.000000e+00> : vector<8xf32>
    %111 = vector.multi_reduction <add>, %110, %cst_33 [1] : vector<8x32xf32> to vector<8xf32>
    %112 = vector.shape_cast %111 : vector<8xf32> to vector<8x1xf32>
    %c0_34 = arith.constant 0 : index
    %113 = memref.load %arg9[%c0_34] : memref<1xf32, #tpu.memory_space<smem>>
    %114 = vector.broadcast %113 : f32 to vector<8x1xf32>
    %115 = arith.addf %112, %114 : vector<8x1xf32>
    %116 = arith.negf %115 : vector<8x1xf32>
    %117 = math.exp %116 : vector<8x1xf32>
    %cst_35 = arith.constant 1.000000e+00 : f32
    %118 = vector.broadcast %cst_35 : f32 to vector<8x1xf32>
    %119 = arith.addf %118, %117 : vector<8x1xf32>
    %120 = arith.divf %118, %119 : vector<8x1xf32>
    %c0_36 = arith.constant 0 : index
    %c0_37 = arith.constant 0 : index
    %121 = vector.load %arg10[%c0_36, %c0_37] : memref<8x1xf32, #tpu.memory_space<vmem>>, vector<8x1xf32>
    tpu.vector_store %arg10[%c0_36, %c0_37], %120 {strides = array<i32>} : memref<8x1xf32, #tpu.memory_space<vmem>>, vector<8x1xf32>,
    return
  }
}

</mosaic_0001>

<llo_original>
// kernel: tpu_custom_call.1
$region0: #{tpu_custom_call.1}
  #allocation0 [shape = 'u32[]', space=smem, size = 0x4, offset = 0x4, fixed_abs, tag = 'smem constant byte address 0x4 - core index']
  #allocation1 [shape = 'u32[144,128]{1,0:T(1,128)}', space=vmem, size = 0x12000, scoped, tag = 'internal scratch']
  #allocation2 [shape = 'f32[1]{0:T(128)S(6)}', space=smem, size = 0x200, scoped, tag = 'scoped memory for tpu_custom_call.1']
  %s0 = inlined_call_operand.vmem [shape: s32[8,6], index: 0, kind: input, shape index: {}]
  %s1 = inlined_call_operand.vmem [shape: f32[50,32], index: 1, kind: input, shape index: {}]
  %s2 = inlined_call_operand.vmem [shape: f32[1,32], index: 2, kind: input, shape index: {}]
  %s3 = inlined_call_operand.vmem [shape: f32[1,32], index: 3, kind: input, shape index: {}]
  %s4 = inlined_call_operand.vmem [shape: f32[32,32], index: 4, kind: input, shape index: {}]
  %s5 = inlined_call_operand.vmem [shape: f32[1,32], index: 5, kind: input, shape index: {}]
  %s6 = inlined_call_operand.vmem [shape: f32[1,32], index: 6, kind: input, shape index: {}]
  %s7 = inlined_call_operand.vmem [shape: f32[1,32], index: 7, kind: input, shape index: {}]
  %s8 = inlined_call_operand.vmem [shape: f32[1,32], index: 8, kind: input, shape index: {}]
  %s9 = inlined_call_operand.<no memory space> [shape: f32[1], index: 9, kind: input, shape index: {}]
  %s10 = inlined_call_operand.vmem [shape: f32[8,1], index: 10, kind: output, shape index: {}]
  %s11 = sld [smem:[#allocation0]]
  $region50: #{tpu_custom_call.1} parent=0
    _
  %s13 = ssub.s32 1, %s11
  %s14 = scalar_select 0, %s13, %s11
  %15 = sst [smem:[#allocation2]] %s9
  // Predicated region
  $region2: #{tpu_custom_call.1} parent=0 // pred_check
    _
  $region3: #{tpu_custom_call.1} parent=0 // pred_check_branch
    %17 = sbr.rel (0) target = $region5
  $region4: #{tpu_custom_call.1} parent=0 // pred_region
    _
  $region5: #{tpu_custom_call.1} parent=0 // pred_fallthru
    _
  // Predicated region
  $region6: #{tpu_custom_call.1} parent=0 // pred_check
    _
  $region7: #{tpu_custom_call.1} parent=0 // pred_check_branch
    %19 = sbr.rel (0) target = $region9
  $region8: #{tpu_custom_call.1} parent=0 // pred_region
    _
  $region9: #{tpu_custom_call.1} parent=0 // pred_fallthru
    _
  // Predicated region
  $region10: #{tpu_custom_call.1} parent=0 // pred_check
    _
  $region11: #{tpu_custom_call.1} parent=0 // pred_check_branch
    %21 = sbr.rel (0) target = $region13
  $region12: #{tpu_custom_call.1} parent=0 // pred_region
    _
  $region13: #{tpu_custom_call.1} parent=0 // pred_fallthru
    _
  // Predicated region
  $region14: #{tpu_custom_call.1} parent=0 // pred_check
    _
  $region15: #{tpu_custom_call.1} parent=0 // pred_check_branch
    %23 = sbr.rel (0) target = $region17
  $region16: #{tpu_custom_call.1} parent=0 // pred_region
    _
  $region17: #{tpu_custom_call.1} parent=0 // pred_fallthru
    _
  // Predicated region
  $region18: #{tpu_custom_call.1} parent=0 // pred_check
    _
  $region19: #{tpu_custom_call.1} parent=0 // pred_check_branch
    %25 = sbr.rel (0) target = $region21
  $region20: #{tpu_custom_call.1} parent=0 // pred_region
    _
  $region21: #{tpu_custom_call.1} parent=0 // pred_fallthru
    _
  // Predicated region
  $region22: #{tpu_custom_call.1} parent=0 // pred_check
    _
  $region23: #{tpu_custom_call.1} parent=0 // pred_check_branch
    %27 = sbr.rel (0) target = $region25
  $region24: #{tpu_custom_call.1} parent=0 // pred_region
    _
  $region25: #{tpu_custom_call.1} parent=0 // pred_fallthru
    _
  // Predicated region
  $region26: #{tpu_custom_call.1} parent=0 // pred_check
    _
  $region27: #{tpu_custom_call.1} parent=0 // pred_check_branch
    %29 = sbr.rel (0) target = $region29
  $region28: #{tpu_custom_call.1} parent=0 // pred_region
    _
  $region29: #{tpu_custom_call.1} parent=0 // pred_fallthru
    _
  // Predicated region
  $region30: #{tpu_custom_call.1} parent=0 // pred_check
    _
  $region31: #{tpu_custom_call.1} parent=0 // pred_check_branch
    %31 = sbr.rel (0) target = $region33
  $region32: #{tpu_custom_call.1} parent=0 // pred_region
    _
  $region33: #{tpu_custom_call.1} parent=0 // pred_fallthru
    _
  // Predicated region
  $region34: #{tpu_custom_call.1} parent=0 // pred_check
    _
  $region35: #{tpu_custom_call.1} parent=0 // pred_check_branch
    %33 = sbr.rel (0) target = $region37
  $region36: #{tpu_custom_call.1} parent=0 // pred_region
    _
  $region37: #{tpu_custom_call.1} parent=0 // pred_fallthru
    _
  // Predicated region
  $region38: #{tpu_custom_call.1} parent=0 // pred_check
    _
  $region39: #{tpu_custom_call.1} parent=0 // pred_check_branch
    %35 = sbr.rel (0) target = $region41
  $region40: #{tpu_custom_call.1} parent=0 // pred_region
    _
  $region41: #{tpu_custom_call.1} parent=0 // pred_fallthru
    _
  %v36 = vld [vmem:[%s0] sm:$0xff]
  %v37 = vlaneseq
  %v38 = vand.u32 %v37, 127
  %39 = vset.pattern.permute.xlu0 0
  %40 = vperm.xlu0 %39, %v36
  %v41 = vpop.permute.xlu0 %40
  %vm42 = vcmp.eq.s32.totalorder %v41, %v38
  %v43 = vsel %vm42, 1, 0
  %v44 = vcvt.s32.f32 %v43
  %v45 = vadd.f32 %v44, 0.0
  %46 = vset.pattern.permute.xlu0 1
  %47 = vperm.xlu0 %46, %v36
  %v48 = vpop.permute.xlu0 %47
  %vm49 = vcmp.eq.s32.totalorder %v48, %v38
  %v50 = vsel %vm49, 1, 0
  %v51 = vcvt.s32.f32 %v50
  %v52 = vadd.f32 %v45, %v51
  %53 = vset.pattern.permute.xlu0 2
  %54 = vperm.xlu0 %53, %v36
  %v55 = vpop.permute.xlu0 %54
  %vm56 = vcmp.eq.s32.totalorder %v55, %v38
  %v57 = vsel %vm56, 1, 0
  %v58 = vcvt.s32.f32 %v57
  %v59 = vadd.f32 %v52, %v58
  %60 = vset.pattern.permute.xlu0 3
  %61 = vperm.xlu0 %60, %v36
  %v62 = vpop.permute.xlu0 %61
  %vm63 = vcmp.eq.s32.totalorder %v62, %v38
  %v64 = vsel %vm63, 1, 0
  %v65 = vcvt.s32.f32 %v64
  %v66 = vadd.f32 %v59, %v65
  %67 = vset.pattern.permute.xlu0 4
  %68 = vperm.xlu0 %67, %v36
  %v69 = vpop.permute.xlu0 %68
  %vm70 = vcmp.eq.s32.totalorder %v69, %v38
  %v71 = vsel %vm70, 1, 0
  %v72 = vcvt.s32.f32 %v71
  %v73 = vadd.f32 %v66, %v72
  %74 = vset.pattern.permute.xlu0 5
  %75 = vperm.xlu0 %74, %v36
  %v76 = vpop.permute.xlu0 %75
  %vm77 = vcmp.eq.s32.totalorder %v76, %v38
  %v78 = vsel %vm77, 1, 0
  %v79 = vcvt.s32.f32 %v78
  %v80 = vadd.f32 %v73, %v79
  %v81 = vld [vmem:[%s1] sm:$0xff]
  %v82 = vld [vmem:[%s1 + $0x8] sm:$0xff]
  %v83 = vld [vmem:[%s1 + $0x10] sm:$0xff]
  %v84 = vld [vmem:[%s1 + $0x18] sm:$0xff]
  %v85 = vld [vmem:[%s1 + $0x20] sm:$0xff]
  %v86 = vld [vmem:[%s1 + $0x28] sm:$0xff]
  %v87 = vld [vmem:[%s1 + $0x30] sm:$0x3]
  %vm88 = vcmask 408576
  %v90 = vsel %vm88, %v80, 0
  %vm92 = vcmask 1041408
  %v94 = vsel %vm92, %v87, 0
  %96 = vmatprep.subr.mxu0 0.0
  %97 = vmatpush1.msra.mxu0 0.0
  %98 = vmatprep.subr.mxu0 0.0
  %99 = vmatpush1.msra.mxu0 0.0
  %100 = vmatprep.subr.mxu0 0.0
  %101 = vmatpush1.msra.mxu0 0.0
  %102 = vmatprep.subr.mxu0 0.0
  %103 = vmatpush1.msra.mxu0 0.0
  %104 = vmatprep.subr.mxu0 0.0
  %105 = vmatpush1.msra.mxu0 0.0
  %106 = vmatprep.subr.mxu0 0.0
  %107 = vmatpush1.msra.mxu0 0.0
  %108 = vmatprep.subr.mxu0 0.0
  %109 = vmatpush1.msra.mxu0 0.0
  %110 = vmatprep.subr.mxu0 0.0
  %111 = vmatpush1.msra.mxu0 0.0
  %112 = vmatprep.subr.mxu0 0.0
  %113 = vmatpush1.msra.mxu0 0.0
  %114 = vmatprep.subr.mxu0 0.0
  %115 = vmatpush1.msra.mxu0 %v94
  %116 = vmatprep.subr.mxu0 0.0
  %117 = vmatpush1.msra.mxu0 %v86
  %118 = vmatprep.subr.mxu0 0.0
  %119 = vmatpush1.msra.mxu0 %v85
  %120 = vmatprep.subr.mxu0 0.0
  %121 = vmatpush1.msra.mxu0 %v84
  %122 = vmatprep.subr.mxu0 0.0
  %123 = vmatpush1.msra.mxu0 %v83
  %124 = vmatprep.subr.mxu0 0.0
  %125 = vmatpush1.msra.mxu0 %v82
  %126 = vmatprep.subr.mxu0 0.0
  %127 = vmatpush1.msra.mxu0 %v81
  %128 = vmatprep.subr.mxu0 0.0
  %129 = vmatpush2.msra.mxu0 0.0
  %130 = vmatprep.subr.mxu0 0.0
  %131 = vmatpush2.msra.mxu0 0.0
  %132 = vmatprep.subr.mxu0 0.0
  %133 = vmatpush2.msra.mxu0 0.0
  %134 = vmatprep.subr.mxu0 0.0
  %135 = vmatpush2.msra.mxu0 0.0
  %136 = vmatprep.subr.mxu0 0.0
  %137 = vmatpush2.msra.mxu0 0.0
  %138 = vmatprep.subr.mxu0 0.0
  %139 = vmatpush2.msra.mxu0 0.0
  %140 = vmatprep.subr.mxu0 0.0
  %141 = vmatpush2.msra.mxu0 0.0
  %142 = vmatprep.subr.mxu0 0.0
  %143 = vmatpush2.msra.mxu0 0.0
  %144 = vmatprep.subr.mxu0 0.0
  %145 = vmatpush2.msra.mxu0 0.0
  %146 = vmatprep.subr.mxu0 0.0
  %147 = vmatpush2.msra.mxu0 0.0
  %148 = vmatprep.subr.mxu0 0.0
  %149 = vmatpush2.msra.mxu0 0.0
  %150 = vmatprep.subr.mxu0 0.0
  %151 = vmatpush2.msra.mxu0 0.0
  %152 = vmatprep.subr.mxu0 0.0
  %153 = vmatpush2.msra.mxu0 0.0
  %154 = vmatprep.subr.mxu0 0.0
  %155 = vmatpush2.msra.mxu0 0.0
  %156 = vmatprep.subr.mxu0 0.0
  %157 = vmatpush2.msra.mxu0 0.0
  %158 = vmatprep.subr.mxu0 0.0
  %159 = vmatpush2.msra.mxu0 0.0
  %160 = vmatprep.mubr.f32.mxu0 0.0
  %161 = vmatmul.mubr.f32.gmra.mxu0 %v90
  %v162 = vpop.f32.mrf.mxu0
  %v163 = vadd.f32 0.0, %v162
  %v164 = vpop.f32.mrf.mxu0
  %165 = vdwg.mxu0
  %v166 = vmul.f32 %v81, %v81
  %v167 = vmul.f32 %v82, %v82
  %v168 = vmul.f32 %v83, %v83
  %v169 = vmul.f32 %v84, %v84
  %v170 = vmul.f32 %v85, %v85
  %v171 = vmul.f32 %v86, %v86
  %v172 = vmul.f32 %v87, %v87
  %v174 = vsel %vm92, %v172, 0
  %176 = vmatprep.subr.mxu0 0.0
  %177 = vmatpush1.msra.mxu0 0.0
  %178 = vmatprep.subr.mxu0 0.0
  %179 = vmatpush1.msra.mxu0 0.0
  %180 = vmatprep.subr.mxu0 0.0
  %181 = vmatpush1.msra.mxu0 0.0
  %182 = vmatprep.subr.mxu0 0.0
  %183 = vmatpush1.msra.mxu0 0.0
  %184 = vmatprep.subr.mxu0 0.0
  %185 = vmatpush1.msra.mxu0 0.0
  %186 = vmatprep.subr.mxu0 0.0
  %187 = vmatpush1.msra.mxu0 0.0
  %188 = vmatprep.subr.mxu0 0.0
  %189 = vmatpush1.msra.mxu0 0.0
  %190 = vmatprep.subr.mxu0 0.0
  %191 = vmatpush1.msra.mxu0 0.0
  %192 = vmatprep.subr.mxu0 0.0
  %193 = vmatpush1.msra.mxu0 0.0
  %194 = vmatprep.subr.mxu0 0.0
  %195 = vmatpush1.msra.mxu0 %v174
  %196 = vmatprep.subr.mxu0 0.0
  %197 = vmatpush1.msra.mxu0 %v171
  %198 = vmatprep.subr.mxu0 0.0
  %199 = vmatpush1.msra.mxu0 %v170
  %200 = vmatprep.subr.mxu0 0.0
  %201 = vmatpush1.msra.mxu0 %v169
  %202 = vmatprep.subr.mxu0 0.0
  %203 = vmatpush1.msra.mxu0 %v168
  %204 = vmatprep.subr.mxu0 0.0
  %205 = vmatpush1.msra.mxu0 %v167
  %206 = vmatprep.subr.mxu0 0.0
  %207 = vmatpush1.msra.mxu0 %v166
  %208 = vmatprep.subr.mxu0 0.0
  %209 = vmatpush2.msra.mxu0 0.0
  %210 = vmatprep.subr.mxu0 0.0
  %211 = vmatpush2.msra.mxu0 0.0
  %212 = vmatprep.subr.mxu0 0.0
  %213 = vmatpush2.msra.mxu0 0.0
  %214 = vmatprep.subr.mxu0 0.0
  %215 = vmatpush2.msra.mxu0 0.0
  %216 = vmatprep.subr.mxu0 0.0
  %217 = vmatpush2.msra.mxu0 0.0
  %218 = vmatprep.subr.mxu0 0.0
  %219 = vmatpush2.msra.mxu0 0.0
  %220 = vmatprep.subr.mxu0 0.0
  %221 = vmatpush2.msra.mxu0 0.0
  %222 = vmatprep.subr.mxu0 0.0
  %223 = vmatpush2.msra.mxu0 0.0
  %224 = vmatprep.subr.mxu0 0.0
  %225 = vmatpush2.msra.mxu0 0.0
  %226 = vmatprep.subr.mxu0 0.0
  %227 = vmatpush2.msra.mxu0 0.0
  %228 = vmatprep.subr.mxu0 0.0
  %229 = vmatpush2.msra.mxu0 0.0
  %230 = vmatprep.subr.mxu0 0.0
  %231 = vmatpush2.msra.mxu0 0.0
  %232 = vmatprep.subr.mxu0 0.0
  %233 = vmatpush2.msra.mxu0 0.0
  %234 = vmatprep.subr.mxu0 0.0
  %235 = vmatpush2.msra.mxu0 0.0
  %236 = vmatprep.subr.mxu0 0.0
  %237 = vmatpush2.msra.mxu0 0.0
  %238 = vmatprep.subr.mxu0 0.0
  %239 = vmatpush2.msra.mxu0 0.0
  %240 = vmatprep.mubr.f32.mxu0 0.0
  %241 = vmatmul.mubr.f32.gmra.mxu0 %v90
  %v242 = vpop.f32.mrf.mxu0
  %v243 = vadd.f32 0.0, %v242
  %v244 = vpop.f32.mrf.mxu0
  %245 = vdwg.mxu0
  %v246 = vmul.f32 %v163, %v163
  %v247 = vsub.f32 %v246, %v243
  %v248 = vmul.f32 %v247, 0.5
  %vm249 = vcmask 261120
  %v250 = vsel %vm249, %v248, 0.0
  %v251 = vrot.slane %v250, 4
  %v252 = vadd.f32 %v250, %v251
  %v253 = vrot.slane %v252, 2
  %v254 = vadd.f32 %v252, %v253
  %v255 = vrot.slane %v254, 1
  %v256 = vadd.f32 %v254, %v255
  %v257 = vrcp.pop 8.0
  %v258 = vmul.f32 %v256, %v257
  %v259 = vsub.f32 %v248, %v258
  %v260 = vmul.f32 %v259, %v259
  %v261 = vsel %vm249, %v260, 0.0
  %v262 = vrot.slane %v261, 4
  %v263 = vadd.f32 %v261, %v262
  %v264 = vrot.slane %v263, 2
  %v265 = vadd.f32 %v263, %v264
  %v266 = vrot.slane %v265, 1
  %v267 = vadd.f32 %v265, %v266
  %v268 = vmul.f32 %v267, %v257
  %v269 = vld [vmem:[%s2] sm:$0x1]
  %v271 = vlaneseq
  %v272 = vshrl.u32 %v271, 7
  %v273 = vsub.s32 0, %v272
  %v274 = vrot.slane %v269, %v273
  %v276 = vmul.f32 %v274, %v259
  %v277 = vadd.f32 %v268, 1e-05
  %v278 = vrsqrt.pop %v277
  %v279 = vmul.f32 %v276, %v278
  %v280 = vld [vmem:[%s3] sm:$0x1]
  %v282 = vlaneseq
  %v283 = vshrl.u32 %v282, 7
  %v284 = vsub.s32 0, %v283
  %v285 = vrot.slane %v280, %v284
  %v287 = vadd.f32 %v279, %v285
  %v288 = vmax.f32 %v287, 0.0
  %v289 = vld [vmem:[%s4] sm:$0xff]
  %v290 = vld [vmem:[%s4 + $0x8] sm:$0xff]
  %v291 = vld [vmem:[%s4 + $0x10] sm:$0xff]
  %v292 = vld [vmem:[%s4 + $0x18] sm:$0xff]
  %v293 = vld [vmem:[%s5] sm:$0x1]
  %v295 = vlaneseq
  %v296 = vshrl.u32 %v295, 7
  %v297 = vsub.s32 0, %v296
  %v298 = vrot.slane %v293, %v297
  %v301 = vsel %vm249, %v288, 0
  %303 = vmatprep.subr.mxu0 0.0
  %304 = vmatpush1.msra.mxu0 0.0
  %305 = vmatprep.subr.mxu0 0.0
  %306 = vmatpush1.msra.mxu0 0.0
  %307 = vmatprep.subr.mxu0 0.0
  %308 = vmatpush1.msra.mxu0 0.0
  %309 = vmatprep.subr.mxu0 0.0
  %310 = vmatpush1.msra.mxu0 0.0
  %311 = vmatprep.subr.mxu0 0.0
  %312 = vmatpush1.msra.mxu0 0.0
  %313 = vmatprep.subr.mxu0 0.0
  %314 = vmatpush1.msra.mxu0 0.0
  %315 = vmatprep.subr.mxu0 0.0
  %316 = vmatpush1.msra.mxu0 0.0
  %317 = vmatprep.subr.mxu0 0.0
  %318 = vmatpush1.msra.mxu0 0.0
  %319 = vmatprep.subr.mxu0 0.0
  %320 = vmatpush1.msra.mxu0 0.0
  %321 = vmatprep.subr.mxu0 0.0
  %322 = vmatpush1.msra.mxu0 0.0
  %323 = vmatprep.subr.mxu0 0.0
  %324 = vmatpush1.msra.mxu0 0.0
  %325 = vmatprep.subr.mxu0 0.0
  %326 = vmatpush1.msra.mxu0 0.0
  %327 = vmatprep.subr.mxu0 0.0
  %328 = vmatpush1.msra.mxu0 %v292
  %329 = vmatprep.subr.mxu0 0.0
  %330 = vmatpush1.msra.mxu0 %v291
  %331 = vmatprep.subr.mxu0 0.0
  %332 = vmatpush1.msra.mxu0 %v290
  %333 = vmatprep.subr.mxu0 0.0
  %334 = vmatpush1.msra.mxu0 %v289
  %335 = vmatprep.subr.mxu0 0.0
  %336 = vmatpush2.msra.mxu0 0.0
  %337 = vmatprep.subr.mxu0 0.0
  %338 = vmatpush2.msra.mxu0 0.0
  %339 = vmatprep.subr.mxu0 0.0
  %340 = vmatpush2.msra.mxu0 0.0
  %341 = vmatprep.subr.mxu0 0.0
  %342 = vmatpush2.msra.mxu0 0.0
  %343 = vmatprep.subr.mxu0 0.0
  %344 = vmatpush2.msra.mxu0 0.0
  %345 = vmatprep.subr.mxu0 0.0
  %346 = vmatpush2.msra.mxu0 0.0
  %347 = vmatprep.subr.mxu0 0.0
  %348 = vmatpush2.msra.mxu0 0.0
  %349 = vmatprep.subr.mxu0 0.0
  %350 = vmatpush2.msra.mxu0 0.0
  %351 = vmatprep.subr.mxu0 0.0
  %352 = vmatpush2.msra.mxu0 0.0
  %353 = vmatprep.subr.mxu0 0.0
  %354 = vmatpush2.msra.mxu0 0.0
  %355 = vmatprep.subr.mxu0 0.0
  %356 = vmatpush2.msra.mxu0 0.0
  %357 = vmatprep.subr.mxu0 0.0
  %358 = vmatpush2.msra.mxu0 0.0
  %359 = vmatprep.subr.mxu0 0.0
  %360 = vmatpush2.msra.mxu0 0.0
  %361 = vmatprep.subr.mxu0 0.0
  %362 = vmatpush2.msra.mxu0 0.0
  %363 = vmatprep.subr.mxu0 0.0
  %364 = vmatpush2.msra.mxu0 0.0
  %365 = vmatprep.subr.mxu0 0.0
  %366 = vmatpush2.msra.mxu0 0.0
  %367 = vmatprep.mubr.f32.mxu0 0.0
  %368 = vmatmul.mubr.f32.gmra.mxu0 %v301
  %v369 = vpop.f32.mrf.mxu0
  %v370 = vadd.f32 %v298, %v369
  %v371 = vpop.f32.mrf.mxu0
  %372 = vdwg.mxu0
  %v373 = vsel %vm249, %v370, 0.0
  %v374 = vrot.slane %v373, 4
  %v375 = vadd.f32 %v373, %v374
  %v376 = vrot.slane %v375, 2
  %v377 = vadd.f32 %v375, %v376
  %v378 = vrot.slane %v377, 1
  %v379 = vadd.f32 %v377, %v378
  %v380 = vmul.f32 %v379, %v257
  %v381 = vsub.f32 %v370, %v380
  %v382 = vmul.f32 %v381, %v381
  %v383 = vsel %vm249, %v382, 0.0
  %v384 = vrot.slane %v383, 4
  %v385 = vadd.f32 %v383, %v384
  %v386 = vrot.slane %v385, 2
  %v387 = vadd.f32 %v385, %v386
  %v388 = vrot.slane %v387, 1
  %v389 = vadd.f32 %v387, %v388
  %v390 = vmul.f32 %v389, %v257
  %v391 = vld [vmem:[%s6] sm:$0x1]
  %v393 = vlaneseq
  %v394 = vshrl.u32 %v393, 7
  %v395 = vsub.s32 0, %v394
  %v396 = vrot.slane %v391, %v395
  %v398 = vmul.f32 %v396, %v381
  %v399 = vadd.f32 %v390, 1e-05
  %v400 = vrsqrt.pop %v399
  %v401 = vmul.f32 %v398, %v400
  %v402 = vld [vmem:[%s7] sm:$0x1]
  %v404 = vlaneseq
  %v405 = vshrl.u32 %v404, 7
  %v406 = vsub.s32 0, %v405
  %v407 = vrot.slane %v402, %v406
  %v409 = vadd.f32 %v401, %v407
  %v410 = vmax.f32 %v409, 0.0
  %v411 = vld [vmem:[%s8] sm:$0x1]
  %v413 = vlaneseq
  %v414 = vshrl.u32 %v413, 7
  %v415 = vsub.s32 0, %v414
  %v416 = vrot.slane %v411, %v415
  %v418 = vmul.f32 %v410, %v416
  %v419 = vsel %vm249, %v418, 0.0
  %420 = vadd.xlane.f32.xlu0 %v419
  %v421 = vpop.xlane.xlu0 %420
  %s422 = sld [smem:[#allocation2]]
  %v423 = vstv %s422
  %v424 = vadd.f32 %v421, %v423
  %v425 = vxor.u32 %v424, 2147483648
  %v426 = vmul.f32 %v425, 1.442695
  %v427 = vpow.pop %v426
  %v428 = vadd.f32 %v427, 1.0
  %v429 = vrcp.pop %v428
  %v430 = vmul.f32 1.0, %v429
  %vm431 = vcmask 7168
  %432 = vst.msk [vmem:[%s10] sm:$0xff] %vm431, %v430
  // Predicated region
  $region42: #{tpu_custom_call.1} parent=0 // pred_check
    _
  $region43: #{tpu_custom_call.1} parent=0 // pred_check_branch
    %434 = sbr.rel (0) target = $region45
  $region44: #{tpu_custom_call.1} parent=0 // pred_region
    _
  $region45: #{tpu_custom_call.1} parent=0 // pred_fallthru
    _
  // Predicated region
  $region46: #{tpu_custom_call.1} parent=0 // pred_check
    _
  $region47: #{tpu_custom_call.1} parent=0 // pred_check_branch
    %436 = sbr.rel (0) target = $region49
  $region48: #{tpu_custom_call.1} parent=0 // pred_region
    _
  $region49: #{tpu_custom_call.1} parent=0 // pred_fallthru
    _

</llo_original>
